<compile_context>
chip_gen: v7x
topology: tpu7x:2x2x1
jax: 0.10.0
libtpu: 0.0.40
codegen_flags: <defaults>
</compile_context>

<pallas_src>
import jax
import jax.numpy as jnp
import numpy as np
from jax import lax
from jax.experimental import pallas as pl
from jax.experimental.pallas import tpu as pltpu


def _cbam_kernel(x_ref, w1_ref, w2_ref, m_ref, o_ref):
    # x_ref block: (Bt, C, HW); HW on the lane axis -> lane-dense load/store.
    x = x_ref[...].astype(jnp.float32)
    bt, c, hw = x.shape

    # ---------------- channel attention ----------------
    avg = jnp.mean(x, axis=2)                         # (Bt, C)  lane reduction
    mxp = jnp.max(x, axis=2)                          # (Bt, C)
    pooled = jnp.concatenate([avg, mxp], axis=0)      # (2*Bt, C): fused fc input
    h = jnp.maximum(
        jnp.dot(pooled, w1_ref[...], preferred_element_type=jnp.float32), 0.0)
    y = jnp.dot(h, w2_ref[...], preferred_element_type=jnp.float32)
    ca = jax.nn.sigmoid(y[:bt] + y[bt:])              # (Bt, C)

    x1 = x * ca[:, :, None]                           # channel-attended features

    # ---------------- spatial attention ----------------
    sp_avg = jnp.mean(x1, axis=1)                     # (Bt, HW) sublane reduction
    sp_max = jnp.max(x1, axis=1)                      # (Bt, HW)
    sp = jnp.concatenate([sp_avg, sp_max], axis=1)    # (Bt, 2*HW)
    # Whole 7x7 'same' conv as ONE MXU matmul; bf16 operands, f32 accumulate.
    conv = jnp.dot(sp.astype(m_ref.dtype), m_ref[...],
                   preferred_element_type=jnp.float32)    # (Bt, HW)
    sa = jax.nn.sigmoid(conv)

    # Single fused final scale + store (one lane-dense vst pass).
    o_ref[...] = (x1 * sa[:, None, :]).astype(o_ref.dtype)


def _build_conv_matrix(wsa, H, W, K, dtype=jnp.bfloat16):
    """Dense (2*H*W, H*W) matrix M s.t. [sp_avg ; sp_max] @ M == conv7x7 output.

    M[p, q] = wsa[c, h'-h+P, w'-w+P] for p=(c, h', w') flattened input index
    and q=(h, w) flattened output index, zero outside the kernel support
    (which also implements the zero 'same' padding).
    """
    P = K // 2
    hw = H * W
    idx = jnp.arange(hw)
    hi, wi = idx // W, idx % W                        # input coords (rows of M)
    ho, wo = idx // W, idx % W                        # output coords (cols of M)
    di = hi[:, None] - ho[None, :] + P                # (hw, hw)
    dj = wi[:, None] - wo[None, :] + P
    mask = (di >= 0) & (di < K) & (dj >= 0) & (dj < K)
    di_c = jnp.clip(di, 0, K - 1)
    dj_c = jnp.clip(dj, 0, K - 1)
    w = wsa.astype(jnp.float32)
    m_avg = jnp.where(mask, w[0][di_c, dj_c], 0.0)    # (hw, hw)
    m_max = jnp.where(mask, w[1][di_c, dj_c], 0.0)    # (hw, hw)
    return jnp.concatenate([m_avg, m_max], axis=0).astype(dtype)   # (2*hw, hw)


def cbam_pallas(x_nchw, w1_t, w2_t, wsa, kernel_size=7):
    """x_nchw: (B, C, H, W); w1_t: (Cr, C); w2_t: (C, Cr); wsa: (2, K, K)."""
    B, C, H, W = x_nchw.shape
    Cr = w1_t.shape[0]
    HW = H * W
    itemsize = x_nchw.dtype.itemsize

    x_flat = x_nchw.reshape(B, C, HW)                 # free, stays contiguous
    w1k = jnp.transpose(w1_t).astype(jnp.float32)     # (C, Cr)
    w2k = jnp.transpose(w2_t).astype(jnp.float32)     # (Cr, C)
    m_comb = _build_conv_matrix(wsa, H, W, kernel_size, jnp.bfloat16)  # (2HW,HW)

    # ---- VMEM-aware tile sizing -------------------------------------------
    try:
        vmem_cap = int(getattr(pltpu.get_tpu_info(), "vmem_capacity_bytes",
                               64 << 20))
    except Exception:                                  # pragma: no cover
        vmem_cap = 64 << 20                            # assume v7x (tightest)
    usable = max(16 << 20, vmem_cap // 2)              # scoped-VMEM budget

    # Grid-invariant operands (pipeline double-buffers them; bf16 halves the
    # conv-matrix share).  Single-buffering via pl.Buffered(1) would halve this
    # again but the saving is ~256 KiB at these sizes.
    const_bytes = 2 * (m_comb.size * m_comb.dtype.itemsize
                       + w1k.size * 4 + w2k.size * 4)
    # Per-image live bytes: double-buffered in + out blocks (native dtype) plus
    # ~3 full-size f32 intermediates (x, x1, x1*sa) inside the kernel.
    # TODO(synk): for bf16 inputs, keep x/x1 in bf16 on v6e/v7x to double bt.
    per_img = 4 * C * HW * itemsize + 3 * C * HW * 4
    budget = usable - const_bytes - (4 << 20)          # headroom for misc scratch
    bt_budget = max(1, budget // per_img)
    # >= 2 grid steps whenever B >= 2 so the "parallel" batch axis can shard
    # across both v7x TensorCores.
    bt = int(max(1, min(bt_budget, pl.cdiv(B, 2) if B >= 2 else B, B)))
    grid = (pl.cdiv(B, bt),)                           # tail block is masked

    cost = pl.CostEstimate(
        flops=int(2 * B * (2 * HW) * HW + 8 * B * C * Cr + 6 * B * C * HW),
        transcendentals=int(B * (C + HW)),
        bytes_accessed=int(2 * B * C * HW * itemsize
                           + m_comb.size * m_comb.dtype.itemsize),
    )

    out_flat = pl.pallas_call(
        _cbam_kernel,
        out_shape=jax.ShapeDtypeStruct((B, C, HW), x_nchw.dtype),
        grid=grid,
        in_specs=[
            pl.BlockSpec((bt, C, HW), lambda b: (b, 0, 0)),
            pl.BlockSpec((C, Cr), lambda b: (0, 0)),
            pl.BlockSpec((Cr, C), lambda b: (0, 0)),
            pl.BlockSpec((2 * HW, HW), lambda b: (0, 0)),
        ],
        out_specs=pl.BlockSpec((bt, C, HW), lambda b: (b, 0, 0)),
        compiler_params=pltpu.CompilerParams(
            dimension_semantics=("parallel",),
            vmem_limit_bytes=int(usable)),
        cost_estimate=cost,
    )(x_flat, w1k, w2k, m_comb)

    return out_flat.reshape(B, C, H, W)


def cbam_reference(x, w1_t, w2_t, wsa, kernel_size=7):
    """Pure-JAX reference matching the PyTorch module (NCHW, all f32)."""
    P = kernel_size // 2
    avg = jnp.mean(x, axis=(2, 3), keepdims=True)      # (B, C, 1, 1)
    mxp = jnp.max(x, axis=(2, 3), keepdims=True)

    def fc(v):
        h = jnp.einsum('bcij,rc->brij', v, w1_t)        # 1x1 conv, no bias
        h = jax.nn.relu(h)
        return jnp.einsum('brij,cr->bcij', h, w2_t)     # 1x1 conv, no bias

    ca = jax.nn.sigmoid(fc(avg) + fc(mxp))
    x1 = x * ca

    sp = jnp.concatenate([jnp.mean(x1, axis=1, keepdims=True),
                          jnp.max(x1, axis=1, keepdims=True)], axis=1)
    conv = lax.conv_general_dilated(
        sp, wsa[None].astype(jnp.float32), (1, 1),
        padding=[(P, P), (P, P)],
        dimension_numbers=('NCHW', 'OIHW', 'NCHW'))
    sa = jax.nn.sigmoid(conv)
    return x1 * sa


if __name__ == "__main__":
    # Small shapes consistent with CBAM(in_planes=32, ratio=16, kernel_size=7).
    B, C, H, W = 2, 32, 16, 16
    ratio, K = 16, 7
    Cr = C // ratio

    key = jax.random.PRNGKey(0)
    kx, k1, k2, k3 = jax.random.split(key, 4)
    x = jax.random.normal(kx, (B, C, H, W), dtype=jnp.float32)
    # Deterministic synthetic weights (shapes per nn.Conv2d in __init__):
    w1_t = jax.random.normal(k1, (Cr, C), dtype=jnp.float32) * 0.2   # Conv2d(C, Cr, 1)
    w2_t = jax.random.normal(k2, (C, Cr), dtype=jnp.float32) * 0.2   # Conv2d(Cr, C, 1)
    wsa = jax.random.normal(k3, (2, K, K), dtype=jnp.float32) * 0.1  # Conv2d(2, 1, 7)

    out = jax.block_until_ready(cbam_pallas(x, w1_t, w2_t, wsa, kernel_size=K))
    ref = jax.block_until_ready(cbam_reference(x, w1_t, w2_t, wsa, kernel_size=K))

    # bf16 MXU operands for the 7x7-conv matmul (per perf review) bound the
    # error at ~1e-3; everything else (pooling, fc, sigmoids, scaling) is f32.
    np.testing.assert_allclose(np.asarray(out), np.asarray(ref),
                               rtol=3e-2, atol=3e-3)
    print("KERNEL_OK")
</pallas_src>

<mosaic_0001>
module attributes {stable_mosaic.version = 11 : i64} {
  func.func @_cbam_kernel(%arg0: i32, %arg1: memref<1x32x256xf32, #tpu.memory_space<vmem>>, %arg2: memref<32x2xf32, #tpu.memory_space<vmem>>, %arg3: memref<2x32xf32, #tpu.memory_space<vmem>>, %arg4: memref<512x256xbf16, #tpu.memory_space<vmem>>, %arg5: memref<1x32x256xf32, #tpu.memory_space<vmem>>) attributes {dimension_semantics = [#tpu.dimension_semantics<parallel>], iteration_bounds = array<i64: 2>, scalar_prefetch = 0 : i64, scratch_operands = 0 : i64, tpu.core_type = #tpu.core_type<tc>, window_params = [{transform_indices = @transform_0, window_bounds = array<i64: 1, 32, 256>}, {pipeline_mode = #tpu.pipeline_mode<synchronous>, transform_indices = @transform_1, window_bounds = array<i64: 32, 2>}, {pipeline_mode = #tpu.pipeline_mode<synchronous>, transform_indices = @transform_2, window_bounds = array<i64: 2, 32>}, {pipeline_mode = #tpu.pipeline_mode<synchronous>, transform_indices = @transform_3, window_bounds = array<i64: 512, 256>}, {transform_indices = @transform_4, window_bounds = array<i64: 1, 32, 256>}]} {
    %c0 = arith.constant 0 : index
    %c0_0 = arith.constant 0 : index
    %c0_1 = arith.constant 0 : index
    %0 = vector.load %arg1[%c0, %c0_0, %c0_1] : memref<1x32x256xf32, #tpu.memory_space<vmem>>, vector<1x32x256xf32>
    %cst = arith.constant dense<0.000000e+00> : vector<1x32xf32>
    %1 = vector.multi_reduction <add>, %0, %cst [2] : vector<1x32x256xf32> to vector<1x32xf32>
    %cst_2 = arith.constant 2.560000e+02 : f32
    %2 = vector.broadcast %cst_2 : f32 to vector<1x32xf32>
    %3 = arith.divf %1, %2 : vector<1x32xf32>
    %cst_3 = arith.constant dense<0xFF800000> : vector<1x32xf32>
    %4 = vector.multi_reduction <maximumf>, %0, %cst_3 [2] : vector<1x32x256xf32> to vector<1x32xf32>
    %5 = tpu.concatenate %3, %4 in 0 : vector<1x32xf32>, vector<1x32xf32> -> vector<2x32xf32>
    %c0_4 = arith.constant 0 : index
    %c0_5 = arith.constant 0 : index
    %6 = vector.load %arg2[%c0_4, %c0_5] : memref<32x2xf32, #tpu.memory_space<vmem>>, vector<32x2xf32>
    %cst_6 = arith.constant dense<0.000000e+00> : vector<2x2xf32>
    %7 = tpu.matmul %5, %6, %cst_6 {dimension_numbers = #tpu.dot_dimension_numbers<[1], [0], [0], [1], [0, 0, 1, 1], [], []>} : vector<2x32xf32>, vector<32x2xf32>, vector<2x2xf32> -> vector<2x2xf32>
    %cst_7 = arith.constant 0.000000e+00 : f32
    %8 = vector.broadcast %cst_7 : f32 to vector<2x2xf32>
    %9 = arith.maximumf %7, %8 : vector<2x2xf32>
    %c0_8 = arith.constant 0 : index
    %c0_9 = arith.constant 0 : index
    %10 = vector.load %arg3[%c0_8, %c0_9] : memref<2x32xf32, #tpu.memory_space<vmem>>, vector<2x32xf32>
    %cst_10 = arith.constant dense<0.000000e+00> : vector<2x32xf32>
    %11 = tpu.matmul %9, %10, %cst_10 {dimension_numbers = #tpu.dot_dimension_numbers<[1], [0], [0], [1], [0, 0, 1, 1], [], []>} : vector<2x2xf32>, vector<2x32xf32>, vector<2x32xf32> -> vector<2x32xf32>
    %12 = vector.extract_strided_slice %11 {offsets = [0, 0], sizes = [1, 32], strides = [1, 1]} : vector<2x32xf32> to vector<1x32xf32>
    %13 = vector.extract_strided_slice %11 {offsets = [1, 0], sizes = [1, 32], strides = [1, 1]} : vector<2x32xf32> to vector<1x32xf32>
    %14 = arith.addf %12, %13 : vector<1x32xf32>
    %15 = arith.negf %14 : vector<1x32xf32>
    %16 = math.exp %15 : vector<1x32xf32>
    %cst_11 = arith.constant 1.000000e+00 : f32
    %17 = vector.broadcast %cst_11 : f32 to vector<1x32xf32>
    %18 = arith.addf %17, %16 : vector<1x32xf32>
    %19 = arith.divf %17, %18 : vector<1x32xf32>
    %20 = vector.shape_cast %19 : vector<1x32xf32> to vector<1x32x1xf32>
    %21 = vector.broadcast %20 : vector<1x32x1xf32> to vector<1x32x256xf32>
    %22 = arith.mulf %0, %21 : vector<1x32x256xf32>
    %cst_12 = arith.constant dense<0.000000e+00> : vector<1x256xf32>
    %23 = vector.multi_reduction <add>, %22, %cst_12 [1] : vector<1x32x256xf32> to vector<1x256xf32>
    %cst_13 = arith.constant 3.200000e+01 : f32
    %24 = vector.broadcast %cst_13 : f32 to vector<1x256xf32>
    %25 = arith.divf %23, %24 : vector<1x256xf32>
    %cst_14 = arith.constant dense<0xFF800000> : vector<1x256xf32>
    %26 = vector.multi_reduction <maximumf>, %22, %cst_14 [1] : vector<1x32x256xf32> to vector<1x256xf32>
    %27 = tpu.concatenate %25, %26 in 1 : vector<1x256xf32>, vector<1x256xf32> -> vector<1x512xf32>
    %28 = arith.truncf %27 : vector<1x512xf32> to vector<1x512xbf16>
    %c0_15 = arith.constant 0 : index
    %c0_16 = arith.constant 0 : index
    %29 = vector.load %arg4[%c0_15, %c0_16] : memref<512x256xbf16, #tpu.memory_space<vmem>>, vector<512x256xbf16>
    %cst_17 = arith.constant dense<0.000000e+00> : vector<1x256xf32>
    %30 = tpu.matmul %28, %29, %cst_17 {dimension_numbers = #tpu.dot_dimension_numbers<[1], [0], [0], [1], [0, 0, 1, 1], [], []>} : vector<1x512xbf16>, vector<512x256xbf16>, vector<1x256xf32> -> vector<1x256xf32>
    %31 = arith.negf %30 : vector<1x256xf32>
    %32 = math.exp %31 : vector<1x256xf32>
    %cst_18 = arith.constant 1.000000e+00 : f32
    %33 = vector.broadcast %cst_18 : f32 to vector<1x256xf32>
    %34 = arith.addf %33, %32 : vector<1x256xf32>
    %35 = arith.divf %33, %34 : vector<1x256xf32>
    %36 = vector.shape_cast %35 : vector<1x256xf32> to vector<1x1x256xf32>
    %37 = vector.broadcast %36 : vector<1x1x256xf32> to vector<1x32x256xf32>
    %38 = arith.mulf %22, %37 : vector<1x32x256xf32>
    %c0_19 = arith.constant 0 : index
    %c0_20 = arith.constant 0 : index
    %c0_21 = arith.constant 0 : index
    %39 = vector.load %arg5[%c0_19, %c0_20, %c0_21] : memref<1x32x256xf32, #tpu.memory_space<vmem>>, vector<1x32x256xf32>
    tpu.vector_store %arg5[%c0_19, %c0_20, %c0_21], %38 {strides = array<i32>} : memref<1x32x256xf32, #tpu.memory_space<vmem>>, vector<1x32x256xf32>,
    return
  }
  func.func @transform_0(%arg0: i32) -> (i32, i32, i32) {
    %c0_i32 = arith.constant 0 : i32
    %c0_i32_0 = arith.constant 0 : i32
    %c0_i32_1 = arith.constant 0 : i32
    return %arg0, %c0_i32, %c0_i32_0 : i32, i32, i32
  }
  func.func @transform_1(%arg0: i32) -> (i32, i32) {
    %c0_i32 = arith.constant 0 : i32
    %c0_i32_0 = arith.constant 0 : i32
    %c0_i32_1 = arith.constant 0 : i32
    return %c0_i32, %c0_i32_0 : i32, i32
  }
  func.func @transform_2(%arg0: i32) -> (i32, i32) {
    %c0_i32 = arith.constant 0 : i32
    %c0_i32_0 = arith.constant 0 : i32
    %c0_i32_1 = arith.constant 0 : i32
    return %c0_i32, %c0_i32_0 : i32, i32
  }
  func.func @transform_3(%arg0: i32) -> (i32, i32) {
    %c0_i32 = arith.constant 0 : i32
    %c0_i32_0 = arith.constant 0 : i32
    %c0_i32_1 = arith.constant 0 : i32
    return %c0_i32, %c0_i32_0 : i32, i32
  }
  func.func @transform_4(%arg0: i32) -> (i32, i32, i32) {
    %c0_i32 = arith.constant 0 : i32
    %c0_i32_0 = arith.constant 0 : i32
    %c0_i32_1 = arith.constant 0 : i32
    return %arg0, %c0_i32, %c0_i32_0 : i32, i32, i32
  }
}

</mosaic_0001>

<llo_original>
// kernel: tpu_custom_call.1
$region0: #{tpu_custom_call.1}
  #allocation0 [shape = 'u32[]', space=smem, size = 0x4, offset = 0x4, fixed_abs, tag = 'smem constant byte address 0x4 - core index']
  #allocation1 [shape = 'u32[144,128]{1,0:T(1,128)}', space=vmem, size = 0x12000, scoped, tag = 'internal scratch']
  %s0 = inlined_call_operand.hbm [shape: f32[2,32,256], index: 0, kind: input, shape index: {}]
  %s1 = inlined_call_operand.vmem [shape: f32[32,2], index: 1, kind: input, shape index: {}]
  %s2 = inlined_call_operand.vmem [shape: f32[2,32], index: 2, kind: input, shape index: {}]
  %s3 = inlined_call_operand.hbm [shape: bf16[512,256], index: 3, kind: input, shape index: {}]
  %s4 = inlined_call_operand.hbm [shape: f32[2,32,256], index: 4, kind: output, shape index: {}]
  %s5 = sld [smem:[#allocation0]]
  $region57: #{tpu_custom_call.1} parent=0
    _
  %s7 = ssub.s32 1, %s5
  %s8 = scalar_select 0, %s7, %s5
  $region1: #{tpu_custom_call.1} parent=0
    #allocation2 [shape = 'u8[65536]{0}', space=vmem, size = 0x10000, scoped, tag = 'input window, operand 0']
    #allocation3 [shape = 's32[2]{0}', space=sflag, size = 0x8, scoped, tag = 'scoped memory for tpu_custom_call.1']
    #allocation4 [shape = 's32[2]{0}', space=sflag, size = 0x8, scoped, tag = 'scoped memory for tpu_custom_call.1']
    #allocation5 [shape = 'u8[262144]{0}', space=vmem, size = 0x40000, scoped, tag = 'input window, operand 3, single buffered']
    #allocation6 [shape = 's32[1]{0}', space=sflag, size = 0x4, scoped, tag = 'scoped memory for tpu_custom_call.1']
    #allocation7 [shape = 'u8[65536]{0}', space=vmem, size = 0x10000, scoped, tag = 'output window, operand 0']
    %9 = vsyncpa [#allocation3], 0
    %s10 = scalar_lea.sflag [#allocation3], 1
    %11 = vsyncpa %s10, 0
    %12 = vsyncpa [#allocation6], 0
    %13 = vsyncpa [#allocation4], 0
    %s14 = scalar_lea.sflag [#allocation4], 1
    %15 = vsyncpa %s14, 0
    loop: start=0, step=1, limit=4
    $region2: #{tpu_custom_call.1} parent=1 // loop_pre_header
      _
    $region3: #{tpu_custom_call.1} parent=1 // loop_header
      %s17 = sphi 0, %s21
      %p18 = scmp.ge.s32.totalorder %s17, 4
      %s27 = sphi 0, %s29
      %s30 = sphi 0, %s27
      %s31 = sphi 0, %s30
      %s47 = sphi 0, %s31
      %s51 = sphi 0, %s51
      %s53 = sphi 0, %s51
      %s54 = sphi 0, %s53
      %s68 = sphi 0, %s54
      %s72 = sphi 0, %s72
      %s74 = sphi 0, %s72
      %s75 = sphi 0, %s74
      %s89 = sphi 0, %s75
      %s93 = sphi 0, %s93
      %s95 = sphi 0, %s93
      %s96 = sphi 0, %s95
      %s110 = sphi 0, %s96
      %s116 = sphi 0, %s118
      %s119 = sphi 0, %s116
      %s120 = sphi 0, %s119
      %s136 = sphi 0, %s120
    $region4: #{tpu_custom_call.1} parent=1 // loop_header_branch
      %20 = sbr.rel (%p18) target = $region8
    $region5: #{tpu_custom_call.1} parent=1 // loop_body
      %s22 = ssub.s32 %s17, 1
      %s23 = ssub.s32 %s17, 2
      %s24 = sadd.s32 %s17, 1
      %s25 = ssub.s32 %s17, %s24
      %p26 = scmp.eq.s32.totalorder %s25, 0
      %s28 = sadd.s32 %s27, 1
      %s29 = scalar_select %p26, %s27, %s28
      %p32 = pneg %p26
      %p33 = scmp.eq.s32.totalorder %s17, 1
      %p34 = por %p32, %p33
      %p35 = scmp.ne.s32.totalorder %s27, %s30
      %p36 = scmp.eq.s32.totalorder %s17, 0
      %p37 = por %p35, %p36
      %p38 = scmp.ne.s32.totalorder %s27, %s30
      %p39 = scmp.eq.s32.totalorder %s22, 1
      %p40 = por %p38, %p39
      %p41 = scmp.ne.s32.totalorder %s30, %s31
      %p42 = scmp.eq.s32.totalorder %s22, 0
      %p43 = por %p41, %p42
      %p44 = scmp.ne.s32.totalorder %s30, %s31
      %p45 = scmp.eq.s32.totalorder %s23, 1
      %p46 = por %p44, %p45
      %p48 = scmp.ne.s32.totalorder %s31, %s47
      %p49 = scmp.eq.s32.totalorder %s23, 0
      %p50 = por %p48, %p49
      %s52 = sadd.s32 %s51, 1
      %p55 = scmp.eq.s32.totalorder %s17, 1
      %p56 = scmp.ne.s32.totalorder %s51, %s53
      %p57 = scmp.eq.s32.totalorder %s17, 0
      %p58 = por %p56, %p57
      %p59 = scmp.ne.s32.totalorder %s51, %s53
      %p60 = scmp.eq.s32.totalorder %s22, 1
      %p61 = por %p59, %p60
      %p62 = scmp.ne.s32.totalorder %s53, %s54
      %p63 = scmp.eq.s32.totalorder %s22, 0
      %p64 = por %p62, %p63
      %p65 = scmp.ne.s32.totalorder %s53, %s54
      %p66 = scmp.eq.s32.totalorder %s23, 1
      %p67 = por %p65, %p66
      %p69 = scmp.ne.s32.totalorder %s54, %s68
      %p70 = scmp.eq.s32.totalorder %s23, 0
      %p71 = por %p69, %p70
      %s73 = sadd.s32 %s72, 1
      %p76 = scmp.eq.s32.totalorder %s17, 1
      %p77 = scmp.ne.s32.totalorder %s72, %s74
      %p78 = scmp.eq.s32.totalorder %s17, 0
      %p79 = por %p77, %p78
      %p80 = scmp.ne.s32.totalorder %s72, %s74
      %p81 = scmp.eq.s32.totalorder %s22, 1
      %p82 = por %p80, %p81
      %p83 = scmp.ne.s32.totalorder %s74, %s75
      %p84 = scmp.eq.s32.totalorder %s22, 0
      %p85 = por %p83, %p84
      %p86 = scmp.ne.s32.totalorder %s74, %s75
      %p87 = scmp.eq.s32.totalorder %s23, 1
      %p88 = por %p86, %p87
      %p90 = scmp.ne.s32.totalorder %s75, %s89
      %p91 = scmp.eq.s32.totalorder %s23, 0
      %p92 = por %p90, %p91
      %s94 = sadd.s32 %s93, 1
      %p97 = scmp.eq.s32.totalorder %s17, 1
      %p98 = scmp.ne.s32.totalorder %s93, %s95
      %p99 = scmp.eq.s32.totalorder %s17, 0
      %p100 = por %p98, %p99
      %p101 = scmp.ne.s32.totalorder %s93, %s95
      %p102 = scmp.eq.s32.totalorder %s22, 1
      %p103 = por %p101, %p102
      %p104 = scmp.ne.s32.totalorder %s95, %s96
      %p105 = scmp.eq.s32.totalorder %s22, 0
      %p106 = por %p104, %p105
      %p107 = scmp.ne.s32.totalorder %s95, %s96
      %p108 = scmp.eq.s32.totalorder %s23, 1
      %p109 = por %p107, %p108
      %p111 = scmp.ne.s32.totalorder %s96, %s110
      %p112 = scmp.eq.s32.totalorder %s23, 0
      %p113 = por %p111, %p112
      %s114 = ssub.s32 %s17, %s24
      %p115 = scmp.eq.s32.totalorder %s114, 0
      %s117 = sadd.s32 %s116, 1
      %s118 = scalar_select %p115, %s116, %s117
      %p121 = pneg %p115
      %p122 = scmp.eq.s32.totalorder %s17, 1
      %p123 = por %p121, %p122
      %p124 = scmp.ne.s32.totalorder %s116, %s119
      %p125 = scmp.eq.s32.totalorder %s17, 0
      %p126 = por %p124, %p125
      %p127 = scmp.ne.s32.totalorder %s116, %s119
      %p128 = scmp.eq.s32.totalorder %s22, 1
      %p129 = por %p127, %p128
      %p130 = scmp.ne.s32.totalorder %s119, %s120
      %p131 = scmp.eq.s32.totalorder %s22, 0
      %p132 = por %p130, %p131
      %p133 = scmp.ne.s32.totalorder %s119, %s120
      %p134 = scmp.eq.s32.totalorder %s23, 1
      %p135 = por %p133, %p134
      %p137 = scmp.ne.s32.totalorder %s120, %s136
      %p138 = scmp.eq.s32.totalorder %s23, 0
      %p139 = por %p137, %p138
      %p140 = scmp.le.s32.totalorder 1, %s17
      %p141 = scmp.lt.s32.totalorder %s17, 3
      %p142 = pnand %p140, %p141
      %p143 = pneg %p142
      // Predicated region
      $region9: #{tpu_custom_call.1} parent=5 // pred_check
        _
      $region10: #{tpu_custom_call.1} parent=5 // pred_check_branch
        %145 = sbr.rel (%p142) target = $region12
      $region11: #{tpu_custom_call.1} parent=5 // pred_region
        %s146 = ssub.s32 %s17, 1
        // Predicated region
        $region13: #{tpu_custom_call.1} parent=11 // pred_check
          %p147 = pneg %p64
        $region14: #{tpu_custom_call.1} parent=11 // pred_check_branch
          %149 = sbr.rel (%p147) target = $region16
        $region15: #{tpu_custom_call.1} parent=11 // pred_region
          _
        $region16: #{tpu_custom_call.1} parent=11 // pred_fallthru
          _
        // Predicated region
        $region17: #{tpu_custom_call.1} parent=11 // pred_check
          %p150 = pneg %p85
        $region18: #{tpu_custom_call.1} parent=11 // pred_check_branch
          %152 = sbr.rel (%p150) target = $region20
        $region19: #{tpu_custom_call.1} parent=11 // pred_region
          _
        $region20: #{tpu_custom_call.1} parent=11 // pred_fallthru
          _
        // Predicated region
        $region21: #{tpu_custom_call.1} parent=11 // pred_check
          %p153 = pneg %p106
        $region22: #{tpu_custom_call.1} parent=11 // pred_check_branch
          %155 = sbr.rel (%p153) target = $region24
        $region23: #{tpu_custom_call.1} parent=11 // pred_region
          %s157 = ssub.s32 8192, 8192
          %158 = vsyncadd [#allocation6], %s157
          %s159 = sshll.u32 [#allocation5], 4
          %s160 = int_to_ptr.vmem [resolvable:$true] %s159
          %165 = dma.hbm_to_vmem [thread:$0]  %s3, 8192, %s160, [#allocation6], 128, 128, 8
        $region24: #{tpu_custom_call.1} parent=11 // pred_fallthru
          _
      $region12: #{tpu_custom_call.1} parent=5 // pred_fallthru
        _
      %p166 = scmp.lt.s32.totalorder %s17, 2
      // Predicated region
      $region25: #{tpu_custom_call.1} parent=5 // pred_check
        %p167 = pneg %p166
      $region26: #{tpu_custom_call.1} parent=5 // pred_check_branch
        %169 = sbr.rel (%p167) target = $region28
      $region27: #{tpu_custom_call.1} parent=5 // pred_region
        // Predicated region
        $region29: #{tpu_custom_call.1} parent=27 // pred_check
          %p170 = pneg %p37
        $region30: #{tpu_custom_call.1} parent=27 // pred_check_branch
          %172 = sbr.rel (%p170) target = $region32
        $region31: #{tpu_custom_call.1} parent=27 // pred_region
          %s173 = sand.u32 %s27, 1
          %s174 = scalar_lea.sflag [#allocation3], %s173
          %s175 = sand.u32 %s27, 1
          %s176 = smul.addr %s175, 64
          %s177 = scalar_lea.vmem [#allocation2], %s176
          %s179 = ssub.s32 1024, 1024
          %180 = vsyncadd %s174, %s179
          %s181 = smul.addr %s17, 8
          %s182 = smul.addr %s181, 128
          %s183 = scalar_lea.hbm %s0, %s182
          %s184 = sshll.u32 %s177, 4
          %s185 = int_to_ptr.vmem [resolvable:$true] %s184
          %190 = dma.hbm_to_vmem [thread:$0]  %s183, 1024, %s185, %s174, 256, 256, 16
        $region32: #{tpu_custom_call.1} parent=27 // pred_fallthru
          _
      $region28: #{tpu_custom_call.1} parent=5 // pred_fallthru
        _
      %p191 = scmp.le.s32.totalorder 1, %s17
      %p192 = scmp.lt.s32.totalorder %s17, 3
      %p193 = pnand %p191, %p192
      %p194 = pneg %p193
      // Predicated region
      $region33: #{tpu_custom_call.1} parent=5 // pred_check
        _
      $region34: #{tpu_custom_call.1} parent=5 // pred_check_branch
        %196 = sbr.rel (%p193) target = $region36
      $region35: #{tpu_custom_call.1} parent=5 // pred_region
        %s197 = ssub.s32 %s17, 1
        %s198 = sand.u32 %s30, 1
        %s199 = scalar_lea.sflag [#allocation3], %s198
        %s200 = sand.u32 %s30, 1
        %s201 = smul.addr %s200, 64
        %s202 = scalar_lea.vmem [#allocation2], %s201
        // Predicated region
        $region37: #{tpu_custom_call.1} parent=35 // pred_check
          %p203 = pneg %p43
        $region38: #{tpu_custom_call.1} parent=35 // pred_check_branch
          %205 = sbr.rel (%p203) target = $region40
        $region39: #{tpu_custom_call.1} parent=35 // pred_region
          %206 = dma.done %s199, 1024
        $region40: #{tpu_custom_call.1} parent=35 // pred_fallthru
          _
        // Predicated region
        $region41: #{tpu_custom_call.1} parent=35 // pred_check
          %p207 = pneg %p106
        $region42: #{tpu_custom_call.1} parent=35 // pred_check_branch
          %209 = sbr.rel (%p207) target = $region44
        $region43: #{tpu_custom_call.1} parent=35 // pred_region
          %210 = dma.done [#allocation6], 8192
        $region44: #{tpu_custom_call.1} parent=35 // pred_fallthru
          _
        %s211 = sand.u32 %s30, 1
        %s212 = scalar_lea.sflag [#allocation3], %s211
        %s213 = sand.u32 %s30, 1
        %s214 = smul.addr %s213, 64
        %s215 = scalar_lea.vmem [#allocation2], %s214
        %p216 = pneg %p43
        %p217 = pneg %p40
        %p218 = pneg %p64
        %p219 = pneg %p61
        %p220 = pneg %p85
        %p221 = pneg %p82
        %p222 = pneg %p106
        %p223 = pneg %p103
        %p224 = pneg %p132
        %p225 = pneg %p129
        %s226 = sand.u32 %s119, 1
        %s227 = scalar_lea.sflag [#allocation4], %s226
        %s228 = sand.u32 %s119, 1
        %s229 = smul.addr %s228, 64
        %s230 = scalar_lea.vmem [#allocation7], %s229
        %v231 = vld [vmem:[%s202] sm:$0xff]
        %v232 = vld [vmem:[%s202 + $0x8] sm:$0xff]
        %v233 = vld [vmem:[%s202 + $0x10] sm:$0xff]
        %v234 = vld [vmem:[%s202 + $0x18] sm:$0xff]
        %v235 = vld [vmem:[%s202 + $0x20] sm:$0xff]
        %v236 = vld [vmem:[%s202 + $0x28] sm:$0xff]
        %v237 = vld [vmem:[%s202 + $0x30] sm:$0xff]
        %v238 = vld [vmem:[%s202 + $0x38] sm:$0xff]
        %v239 = vadd.f32 %v231, %v232
        %240 = vadd.xlane.f32.xlu0 %v239
        %v241 = vpop.xlane.xlu0 %240
        %v242 = vadd.f32 %v233, %v234
        %243 = vadd.xlane.f32.xlu0 %v242
        %v244 = vpop.xlane.xlu0 %243
        %v245 = vadd.f32 %v235, %v236
        %246 = vadd.xlane.f32.xlu0 %v245
        %v247 = vpop.xlane.xlu0 %246
        %v248 = vadd.f32 %v237, %v238
        %249 = vadd.xlane.f32.xlu0 %v248
        %v250 = vpop.xlane.xlu0 %249
        %v251 = vrcp.pop 256.0
        %v252 = vmul.f32 %v241, %v251
        %v253 = vmul.f32 %v244, %v251
        %v254 = vmul.f32 %v247, %v251
        %v255 = vmul.f32 %v250, %v251
        %v256 = vmax.f32 %v231, %v232
        %257 = vmax.xlane.f32.xlu0 %v256
        %v258 = vpop.xlane.xlu0 %257
        %v259 = vmax.f32 %v233, %v234
        %260 = vmax.xlane.f32.xlu0 %v259
        %v261 = vpop.xlane.xlu0 %260
        %v262 = vmax.f32 %v235, %v236
        %263 = vmax.xlane.f32.xlu0 %v262
        %v264 = vpop.xlane.xlu0 %263
        %v265 = vmax.f32 %v237, %v238
        %266 = vmax.xlane.f32.xlu0 %v265
        %v267 = vpop.xlane.xlu0 %266
        %v272 = vlaneseq
        %v273 = vand.u32 %v272, 127
        %v274 = vlaneseq
        %v275 = vshrl.u32 %v274, 7
        %v276 = vsub.s32 %v273, %v275
        %v277 = vrot.slane %v252, %v276
        %v278 = vadd.s32 %v273, 4294967288
        %v279 = vlaneseq
        %v280 = vshrl.u32 %v279, 7
        %v281 = vsub.s32 %v278, %v280
        %v282 = vrot.slane %v253, %v281
        %vm283 = vcmask 130112
        %v284 = vsel %vm283, %v282, %v277
        %v285 = vadd.s32 %v273, 4294967280
        %v286 = vlaneseq
        %v287 = vshrl.u32 %v286, 7
        %v288 = vsub.s32 %v285, %v287
        %v289 = vrot.slane %v254, %v288
        %vm290 = vcmask 195712
        %v291 = vsel %vm290, %v289, %v284
        %v292 = vadd.s32 %v273, 4294967272
        %v293 = vlaneseq
        %v294 = vshrl.u32 %v293, 7
        %v295 = vsub.s32 %v292, %v294
        %v296 = vrot.slane %v255, %v295
        %vm297 = vcmask 261312
        %v298 = vsel %vm297, %v296, %v291
        %v304 = vlaneseq
        %v305 = vshrl.u32 %v304, 7
        %v306 = vsub.s32 %v273, %v305
        %v307 = vrot.slane %v258, %v306
        %v308 = vlaneseq
        %v309 = vshrl.u32 %v308, 7
        %v310 = vsub.s32 %v278, %v309
        %v311 = vrot.slane %v261, %v310
        %v312 = vsel %vm283, %v311, %v307
        %v313 = vlaneseq
        %v314 = vshrl.u32 %v313, 7
        %v315 = vsub.s32 %v285, %v314
        %v316 = vrot.slane %v264, %v315
        %v317 = vsel %vm290, %v316, %v312
        %v318 = vlaneseq
        %v319 = vshrl.u32 %v318, 7
        %v320 = vsub.s32 %v292, %v319
        %v321 = vrot.slane %v267, %v320
        %v322 = vsel %vm297, %v321, %v317
        %vm324 = vcmask 1040384
        %v325 = vsel %vm324, %v298, %v322
        %v326 = vld [vmem:[%s1] sm:$0xff]
        %v327 = vld [vmem:[%s1 + $0x8] sm:$0xff]
        %v328 = vld [vmem:[%s1 + $0x10] sm:$0xff]
        %v329 = vld [vmem:[%s1 + $0x18] sm:$0xff]
        %vm330 = vcmask 261120
        %v332 = vsel %vm330, %v325, 0
        %334 = vmatprep.subr.mxu0 0.0
        %335 = vmatpush1.msra.mxu0 %v326
        %336 = vmatprep.subr.mxu0 0.0
        %337 = vmatpush1.msra.mxu0 %v327
        %338 = vmatprep.subr.mxu0 0.0
        %339 = vmatpush1.msra.mxu0 %v328
        %340 = vmatprep.subr.mxu0 0.0
        %341 = vmatpush1.msra.mxu0 %v329
        %342 = vmatprep.subr.mxu0 0.0
        %343 = vmatpush1.msra.mxu0 0.0
        %344 = vmatprep.subr.mxu0 0.0
        %345 = vmatpush1.msra.mxu0 0.0
        %346 = vmatprep.subr.mxu0 0.0
        %347 = vmatpush1.msra.mxu0 0.0
        %348 = vmatprep.subr.mxu0 0.0
        %349 = vmatpush1.msra.mxu0 0.0
        %350 = vmatprep.subr.mxu0 0.0
        %351 = vmatpush1.msra.mxu0 0.0
        %352 = vmatprep.subr.mxu0 0.0
        %353 = vmatpush1.msra.mxu0 0.0
        %354 = vmatprep.subr.mxu0 0.0
        %355 = vmatpush1.msra.mxu0 0.0
        %356 = vmatprep.subr.mxu0 0.0
        %357 = vmatpush1.msra.mxu0 0.0
        %358 = vmatprep.subr.mxu0 0.0
        %359 = vmatpush1.msra.mxu0 0.0
        %360 = vmatprep.subr.mxu0 0.0
        %361 = vmatpush1.msra.mxu0 0.0
        %362 = vmatprep.subr.mxu0 0.0
        %363 = vmatpush1.msra.mxu0 0.0
        %364 = vmatprep.subr.mxu0 0.0
        %365 = vmatpush1.msra.mxu0 0.0
        %366 = vmatprep.subr.mxu0 0.0
        %367 = vmatpush1.msra.mxu0 0.0
        %368 = vmatprep.subr.mxu0 0.0
        %369 = vmatpush1.msra.mxu0 0.0
        %370 = vmatprep.subr.mxu0 0.0
        %371 = vmatpush1.msra.mxu0 0.0
        %372 = vmatprep.subr.mxu0 0.0
        %373 = vmatpush1.msra.mxu0 0.0
        %374 = vmatprep.subr.mxu0 0.0
        %375 = vmatpush1.msra.mxu0 0.0
        %376 = vmatprep.subr.mxu0 0.0
        %377 = vmatpush1.msra.mxu0 0.0
        %378 = vmatprep.subr.mxu0 0.0
        %379 = vmatpush1.msra.mxu0 0.0
        %380 = vmatprep.subr.mxu0 0.0
        %381 = vmatpush1.msra.mxu0 0.0
        %382 = vmatprep.subr.mxu0 0.0
        %383 = vmatpush1.msra.mxu0 0.0
        %384 = vmatprep.subr.mxu0 0.0
        %385 = vmatpush1.msra.mxu0 0.0
        %386 = vmatprep.subr.mxu0 0.0
        %387 = vmatpush1.msra.mxu0 0.0
        %388 = vmatprep.subr.mxu0 0.0
        %389 = vmatpush1.msra.mxu0 0.0
        %390 = vmatprep.subr.mxu0 0.0
        %391 = vmatpush1.msra.mxu0 0.0
        %392 = vmatprep.subr.mxu0 0.0
        %393 = vmatpush1.msra.mxu0 0.0
        %394 = vmatprep.subr.mxu0 0.0
        %395 = vmatpush1.msra.mxu0 0.0
        %396 = vmatprep.subr.mxu0 0.0
        %397 = vmatpush1.msra.mxu0 0.0
        %398 = vmatprep.mubr.f32.mxu0 0.0
        %399 = vmatmul.mubr.f32.gmra.mrb[0].mxu0 %v332
        %v400 = vpop.f32.mrb[0].mxu0
        %v401 = vadd.f32 0.0, %v400
        %v402 = vpop.f32.mrb[0].mxu0
        %403 = vdwg.mxu0
        %v404 = vmax.f32 %v401, 0.0
        %v405 = vld [vmem:[%s2] sm:$0x3]
        %vm406 = vcmask 15360
        %v408 = vsel %vm406, %v404, 0
        %vm410 = vcmask 1041408
        %v412 = vsel %vm410, %v405, 0
        %414 = vmatprep.subr.mxu0 0.0
        %415 = vmatpush1.msra.mxu0 %v412
        %416 = vmatprep.subr.mxu0 0.0
        %417 = vmatpush1.msra.mxu0 0.0
        %418 = vmatprep.subr.mxu0 0.0
        %419 = vmatpush1.msra.mxu0 0.0
        %420 = vmatprep.subr.mxu0 0.0
        %421 = vmatpush1.msra.mxu0 0.0
        %422 = vmatprep.subr.mxu0 0.0
        %423 = vmatpush1.msra.mxu0 0.0
        %424 = vmatprep.subr.mxu0 0.0
        %425 = vmatpush1.msra.mxu0 0.0
        %426 = vmatprep.subr.mxu0 0.0
        %427 = vmatpush1.msra.mxu0 0.0
        %428 = vmatprep.subr.mxu0 0.0
        %429 = vmatpush1.msra.mxu0 0.0
        %430 = vmatprep.subr.mxu0 0.0
        %431 = vmatpush1.msra.mxu0 0.0
        %432 = vmatprep.subr.mxu0 0.0
        %433 = vmatpush1.msra.mxu0 0.0
        %434 = vmatprep.subr.mxu0 0.0
        %435 = vmatpush1.msra.mxu0 0.0
        %436 = vmatprep.subr.mxu0 0.0
        %437 = vmatpush1.msra.mxu0 0.0
        %438 = vmatprep.subr.mxu0 0.0
        %439 = vmatpush1.msra.mxu0 0.0
        %440 = vmatprep.subr.mxu0 0.0
        %441 = vmatpush1.msra.mxu0 0.0
        %442 = vmatprep.subr.mxu0 0.0
        %443 = vmatpush1.msra.mxu0 0.0
        %444 = vmatprep.subr.mxu0 0.0
        %445 = vmatpush1.msra.mxu0 0.0
        %446 = vmatprep.subr.mxu0 0.0
        %447 = vmatpush1.msra.mxu0 0.0
        %448 = vmatprep.subr.mxu0 0.0
        %449 = vmatpush1.msra.mxu0 0.0
        %450 = vmatprep.subr.mxu0 0.0
        %451 = vmatpush1.msra.mxu0 0.0
        %452 = vmatprep.subr.mxu0 0.0
        %453 = vmatpush1.msra.mxu0 0.0
        %454 = vmatprep.subr.mxu0 0.0
        %455 = vmatpush1.msra.mxu0 0.0
        %456 = vmatprep.subr.mxu0 0.0
        %457 = vmatpush1.msra.mxu0 0.0
        %458 = vmatprep.subr.mxu0 0.0
        %459 = vmatpush1.msra.mxu0 0.0
        %460 = vmatprep.subr.mxu0 0.0
        %461 = vmatpush1.msra.mxu0 0.0
        %462 = vmatprep.subr.mxu0 0.0
        %463 = vmatpush1.msra.mxu0 0.0
        %464 = vmatprep.subr.mxu0 0.0
        %465 = vmatpush1.msra.mxu0 0.0
        %466 = vmatprep.subr.mxu0 0.0
        %467 = vmatpush1.msra.mxu0 0.0
        %468 = vmatprep.subr.mxu0 0.0
        %469 = vmatpush1.msra.mxu0 0.0
        %470 = vmatprep.subr.mxu0 0.0
        %471 = vmatpush1.msra.mxu0 0.0
        %472 = vmatprep.subr.mxu0 0.0
        %473 = vmatpush1.msra.mxu0 0.0
        %474 = vmatprep.subr.mxu0 0.0
        %475 = vmatpush1.msra.mxu0 0.0
        %476 = vmatprep.subr.mxu0 0.0
        %477 = vmatpush1.msra.mxu0 0.0
        %478 = vmatprep.mubr.f32.mxu0 0.0
        %479 = vmatmul.mubr.f32.gmra.mrb[0].mxu0 %v408
        %v480 = vpop.f32.mrb[0].mxu0
        %v481 = vadd.f32 0.0, %v480
        %v482 = vpop.f32.mrb[0].mxu0
        %483 = vdwg.mxu0
        %v485 = vrot.slane %v481, 1
        %v487 = vadd.f32 %v481, %v485
        %v488 = vxor.u32 %v487, 2147483648
        %v489 = vmul.f32 %v488, 1.442695
        %v490 = vpow.pop %v489
        %v491 = vadd.f32 %v490, 1.0
        %v492 = vrcp.pop %v491
        %v493 = vmul.f32 1.0, %v492
        %v494 = vlaneseq
        %v495 = vshrl.u32 %v494, 7
        %v496 = vsub.s32 0, %v495
        %v497 = vrot.slane %v493, %v496
        %499 = vbcast.lane.b32.xlu0 %v497, 256
        %v500 = vpop.permute.xlu0 %499
        %s502 = sor.u32 256, 8
        %503 = vbcast.lane.b32.xlu0 %v497, %s502
        %v504 = vpop.permute.xlu0 %503
        %s506 = sor.u32 256, 16
        %507 = vbcast.lane.b32.xlu0 %v497, %s506
        %v508 = vpop.permute.xlu0 %507
        %s510 = sor.u32 256, 24
        %511 = vbcast.lane.b32.xlu0 %v497, %s510
        %v512 = vpop.permute.xlu0 %511
        %v513 = vmul.f32 %v231, %v500
        %v514 = vmul.f32 %v232, %v500
        %v515 = vmul.f32 %v233, %v504
        %v516 = vmul.f32 %v234, %v504
        %v517 = vmul.f32 %v235, %v508
        %v518 = vmul.f32 %v236, %v508
        %v519 = vmul.f32 %v237, %v512
        %v520 = vmul.f32 %v238, %v512
        %v521 = vadd.f32 %v513, %v515
        %v522 = vadd.f32 %v521, %v517
        %v523 = vadd.f32 %v522, %v519
        %v524 = vrot.slane %v523, 4
        %v525 = vadd.f32 %v523, %v524
        %v526 = vrot.slane %v525, 2
        %v527 = vadd.f32 %v525, %v526
        %v528 = vrot.slane %v527, 1
        %v529 = vadd.f32 %v527, %v528
        %v530 = vadd.f32 %v514, %v516
        %v531 = vadd.f32 %v530, %v518
        %v532 = vadd.f32 %v531, %v520
        %v533 = vrot.slane %v532, 4
        %v534 = vadd.f32 %v532, %v533
        %v535 = vrot.slane %v534, 2
        %v536 = vadd.f32 %v534, %v535
        %v537 = vrot.slane %v536, 1
        %v538 = vadd.f32 %v536, %v537
        %v539 = vrcp.pop 32.0
        %v540 = vmul.f32 %v529, %v539
        %v541 = vmul.f32 %v538, %v539
        %v542 = vmax.f32 %v513, %v517
        %v543 = vmax.f32 %v515, %v519
        %v544 = vmax.f32 %v542, %v543
        %v545 = vrot.slane %v544, 4
        %v546 = vmax.f32 %v544, %v545
        %v547 = vrot.slane %v546, 2
        %v548 = vmax.f32 %v546, %v547
        %v549 = vrot.slane %v548, 1
        %v550 = vmax.f32 %v548, %v549
        %v551 = vmax.f32 %v514, %v518
        %v552 = vmax.f32 %v516, %v520
        %v553 = vmax.f32 %v551, %v552
        %v554 = vrot.slane %v553, 4
        %v555 = vmax.f32 %v553, %v554
        %v556 = vrot.slane %v555, 2
        %v557 = vmax.f32 %v555, %v556
        %v558 = vrot.slane %v557, 1
        %v559 = vmax.f32 %v557, %v558
        %v560 = vpack.c.bf16 %v540, %v540
        %v561 = vpack.c.bf16 %v541, %v541
        %v562 = vpack.c.bf16 %v550, %v550
        %v563 = vpack.c.bf16 %v559, %v559
        %v564 = vld [vmem:[#allocation5] sm:$0xff]
        %v565 = vld [vmem:[#allocation5 + $0x8] sm:$0xff]
        %v566 = vld [vmem:[#allocation5 + $0x10] sm:$0xff]
        %v567 = vld [vmem:[#allocation5 + $0x18] sm:$0xff]
        %v568 = vld [vmem:[#allocation5 + $0x20] sm:$0xff]
        %v569 = vld [vmem:[#allocation5 + $0x28] sm:$0xff]
        %v570 = vld [vmem:[#allocation5 + $0x30] sm:$0xff]
        %v571 = vld [vmem:[#allocation5 + $0x38] sm:$0xff]
        %v572 = vld [vmem:[#allocation5 + $0x40] sm:$0xff]
        %v573 = vld [vmem:[#allocation5 + $0x48] sm:$0xff]
        %v574 = vld [vmem:[#allocation5 + $0x50] sm:$0xff]
        %v575 = vld [vmem:[#allocation5 + $0x58] sm:$0xff]
        %v576 = vld [vmem:[#allocation5 + $0x60] sm:$0xff]
        %v577 = vld [vmem:[#allocation5 + $0x68] sm:$0xff]
        %v578 = vld [vmem:[#allocation5 + $0x70] sm:$0xff]
        %v579 = vld [vmem:[#allocation5 + $0x78] sm:$0xff]
        %v580 = vld [vmem:[#allocation5 + $0x80] sm:$0xff]
        %v581 = vld [vmem:[#allocation5 + $0x88] sm:$0xff]
        %v582 = vld [vmem:[#allocation5 + $0x90] sm:$0xff]
        %v583 = vld [vmem:[#allocation5 + $0x98] sm:$0xff]
        %v584 = vld [vmem:[#allocation5 + $0xa0] sm:$0xff]
        %v585 = vld [vmem:[#allocation5 + $0xa8] sm:$0xff]
        %v586 = vld [vmem:[#allocation5 + $0xb0] sm:$0xff]
        %v587 = vld [vmem:[#allocation5 + $0xb8] sm:$0xff]
        %v588 = vld [vmem:[#allocation5 + $0xc0] sm:$0xff]
        %v589 = vld [vmem:[#allocation5 + $0xc8] sm:$0xff]
        %v590 = vld [vmem:[#allocation5 + $0xd0] sm:$0xff]
        %v591 = vld [vmem:[#allocation5 + $0xd8] sm:$0xff]
        %v592 = vld [vmem:[#allocation5 + $0xe0] sm:$0xff]
        %v593 = vld [vmem:[#allocation5 + $0xe8] sm:$0xff]
        %v594 = vld [vmem:[#allocation5 + $0xf0] sm:$0xff]
        %v595 = vld [vmem:[#allocation5 + $0xf8] sm:$0xff]
        %v596 = vld [vmem:[#allocation5 + $0x100] sm:$0xff]
        %v597 = vld [vmem:[#allocation5 + $0x108] sm:$0xff]
        %v598 = vld [vmem:[#allocation5 + $0x110] sm:$0xff]
        %v599 = vld [vmem:[#allocation5 + $0x118] sm:$0xff]
        %v600 = vld [vmem:[#allocation5 + $0x120] sm:$0xff]
        %v601 = vld [vmem:[#allocation5 + $0x128] sm:$0xff]
        %v602 = vld [vmem:[#allocation5 + $0x130] sm:$0xff]
        %v603 = vld [vmem:[#allocation5 + $0x138] sm:$0xff]
        %v604 = vld [vmem:[#allocation5 + $0x140] sm:$0xff]
        %v605 = vld [vmem:[#allocation5 + $0x148] sm:$0xff]
        %v606 = vld [vmem:[#allocation5 + $0x150] sm:$0xff]
        %v607 = vld [vmem:[#allocation5 + $0x158] sm:$0xff]
        %v608 = vld [vmem:[#allocation5 + $0x160] sm:$0xff]
        %v609 = vld [vmem:[#allocation5 + $0x168] sm:$0xff]
        %v610 = vld [vmem:[#allocation5 + $0x170] sm:$0xff]
        %v611 = vld [vmem:[#allocation5 + $0x178] sm:$0xff]
        %v612 = vld [vmem:[#allocation5 + $0x180] sm:$0xff]
        %v613 = vld [vmem:[#allocation5 + $0x188] sm:$0xff]
        %v614 = vld [vmem:[#allocation5 + $0x190] sm:$0xff]
        %v615 = vld [vmem:[#allocation5 + $0x198] sm:$0xff]
        %v616 = vld [vmem:[#allocation5 + $0x1a0] sm:$0xff]
        %v617 = vld [vmem:[#allocation5 + $0x1a8] sm:$0xff]
        %v618 = vld [vmem:[#allocation5 + $0x1b0] sm:$0xff]
        %v619 = vld [vmem:[#allocation5 + $0x1b8] sm:$0xff]
        %v620 = vld [vmem:[#allocation5 + $0x1c0] sm:$0xff]
        %v621 = vld [vmem:[#allocation5 + $0x1c8] sm:$0xff]
        %v622 = vld [vmem:[#allocation5 + $0x1d0] sm:$0xff]
        %v623 = vld [vmem:[#allocation5 + $0x1d8] sm:$0xff]
        %v624 = vld [vmem:[#allocation5 + $0x1e0] sm:$0xff]
        %v625 = vld [vmem:[#allocation5 + $0x1e8] sm:$0xff]
        %v626 = vld [vmem:[#allocation5 + $0x1f0] sm:$0xff]
        %v627 = vld [vmem:[#allocation5 + $0x1f8] sm:$0xff]
        %v692 = vunpack.c.l.b16 %v564
        %v693 = vunpack.c.h.b16 %v564
        %v694 = vunpack.c.l.b16 %v565
        %v695 = vunpack.c.h.b16 %v565
        %v696 = vunpack.c.l.b16 %v566
        %v697 = vunpack.c.h.b16 %v566
        %v698 = vunpack.c.l.b16 %v567
        %v699 = vunpack.c.h.b16 %v567
        %v700 = vunpack.c.l.b16 %v568
        %v701 = vunpack.c.h.b16 %v568
        %v702 = vunpack.c.l.b16 %v569
        %v703 = vunpack.c.h.b16 %v569
        %v704 = vunpack.c.l.b16 %v570
        %v705 = vunpack.c.h.b16 %v570
        %v706 = vunpack.c.l.b16 %v571
        %v707 = vunpack.c.h.b16 %v571
        %v708 = vunpack.c.l.b16 %v572
        %v709 = vunpack.c.h.b16 %v572
        %v710 = vunpack.c.l.b16 %v573
        %v711 = vunpack.c.h.b16 %v573
        %v712 = vunpack.c.l.b16 %v574
        %v713 = vunpack.c.h.b16 %v574
        %v714 = vunpack.c.l.b16 %v575
        %v715 = vunpack.c.h.b16 %v575
        %v716 = vunpack.c.l.b16 %v576
        %v717 = vunpack.c.h.b16 %v576
        %v718 = vunpack.c.l.b16 %v577
        %v719 = vunpack.c.h.b16 %v577
        %v720 = vunpack.c.l.b16 %v578
        %v721 = vunpack.c.h.b16 %v578
        %v722 = vunpack.c.l.b16 %v579
        %v723 = vunpack.c.h.b16 %v579
        %v724 = vunpack.c.l.b16 %v580
        %v725 = vunpack.c.h.b16 %v580
        %v726 = vunpack.c.l.b16 %v581
        %v727 = vunpack.c.h.b16 %v581
        %v728 = vunpack.c.l.b16 %v582
        %v729 = vunpack.c.h.b16 %v582
        %v730 = vunpack.c.l.b16 %v583
        %v731 = vunpack.c.h.b16 %v583
        %v732 = vunpack.c.l.b16 %v584
        %v733 = vunpack.c.h.b16 %v584
        %v734 = vunpack.c.l.b16 %v585
        %v735 = vunpack.c.h.b16 %v585
        %v736 = vunpack.c.l.b16 %v586
        %v737 = vunpack.c.h.b16 %v586
        %v738 = vunpack.c.l.b16 %v587
        %v739 = vunpack.c.h.b16 %v587
        %v740 = vunpack.c.l.b16 %v588
        %v741 = vunpack.c.h.b16 %v588
        %v742 = vunpack.c.l.b16 %v589
        %v743 = vunpack.c.h.b16 %v589
        %v744 = vunpack.c.l.b16 %v590
        %v745 = vunpack.c.h.b16 %v590
        %v746 = vunpack.c.l.b16 %v591
        %v747 = vunpack.c.h.b16 %v591
        %v748 = vunpack.c.l.b16 %v592
        %v749 = vunpack.c.h.b16 %v592
        %v750 = vunpack.c.l.b16 %v593
        %v751 = vunpack.c.h.b16 %v593
        %v752 = vunpack.c.l.b16 %v594
        %v753 = vunpack.c.h.b16 %v594
        %v754 = vunpack.c.l.b16 %v595
        %v755 = vunpack.c.h.b16 %v595
        %v756 = vunpack.c.l.b16 %v596
        %v757 = vunpack.c.h.b16 %v596
        %v758 = vunpack.c.l.b16 %v597
        %v759 = vunpack.c.h.b16 %v597
        %v760 = vunpack.c.l.b16 %v598
        %v761 = vunpack.c.h.b16 %v598
        %v762 = vunpack.c.l.b16 %v599
        %v763 = vunpack.c.h.b16 %v599
        %v764 = vunpack.c.l.b16 %v600
        %v765 = vunpack.c.h.b16 %v600
        %v766 = vunpack.c.l.b16 %v601
        %v767 = vunpack.c.h.b16 %v601
        %v768 = vunpack.c.l.b16 %v602
        %v769 = vunpack.c.h.b16 %v602
        %v770 = vunpack.c.l.b16 %v603
        %v771 = vunpack.c.h.b16 %v603
        %v772 = vunpack.c.l.b16 %v604
        %v773 = vunpack.c.h.b16 %v604
        %v774 = vunpack.c.l.b16 %v605
        %v775 = vunpack.c.h.b16 %v605
        %v776 = vunpack.c.l.b16 %v606
        %v777 = vunpack.c.h.b16 %v606
        %v778 = vunpack.c.l.b16 %v607
        %v779 = vunpack.c.h.b16 %v607
        %v780 = vunpack.c.l.b16 %v608
        %v781 = vunpack.c.h.b16 %v608
        %v782 = vunpack.c.l.b16 %v609
        %v783 = vunpack.c.h.b16 %v609
        %v784 = vunpack.c.l.b16 %v610
        %v785 = vunpack.c.h.b16 %v610
        %v786 = vunpack.c.l.b16 %v611
        %v787 = vunpack.c.h.b16 %v611
        %v788 = vunpack.c.l.b16 %v612
        %v789 = vunpack.c.h.b16 %v612
        %v790 = vunpack.c.l.b16 %v613
        %v791 = vunpack.c.h.b16 %v613
        %v792 = vunpack.c.l.b16 %v614
        %v793 = vunpack.c.h.b16 %v614
        %v794 = vunpack.c.l.b16 %v615
        %v795 = vunpack.c.h.b16 %v615
        %v796 = vunpack.c.l.b16 %v616
        %v797 = vunpack.c.h.b16 %v616
        %v798 = vunpack.c.l.b16 %v617
        %v799 = vunpack.c.h.b16 %v617
        %v800 = vunpack.c.l.b16 %v618
        %v801 = vunpack.c.h.b16 %v618
        %v802 = vunpack.c.l.b16 %v619
        %v803 = vunpack.c.h.b16 %v619
        %v804 = vunpack.c.l.b16 %v620
        %v805 = vunpack.c.h.b16 %v620
        %v806 = vunpack.c.l.b16 %v621
        %v807 = vunpack.c.h.b16 %v621
        %v808 = vunpack.c.l.b16 %v622
        %v809 = vunpack.c.h.b16 %v622
        %v810 = vunpack.c.l.b16 %v623
        %v811 = vunpack.c.h.b16 %v623
        %v812 = vunpack.c.l.b16 %v624
        %v813 = vunpack.c.h.b16 %v624
        %v814 = vunpack.c.l.b16 %v625
        %v815 = vunpack.c.h.b16 %v625
        %v816 = vunpack.c.l.b16 %v626
        %v817 = vunpack.c.h.b16 %v626
        %v818 = vunpack.c.l.b16 %v627
        %v819 = vunpack.c.h.b16 %v627
        %v820 = vpack.c.b16 %v694, %v692
        %v821 = vpack.c.b16 %v695, %v693
        %v822 = vpack.c.b16 %v698, %v696
        %v823 = vpack.c.b16 %v699, %v697
        %v824 = vpack.c.b16 %v702, %v700
        %v825 = vpack.c.b16 %v703, %v701
        %v826 = vpack.c.b16 %v706, %v704
        %v827 = vpack.c.b16 %v707, %v705
        %v828 = vpack.c.b16 %v710, %v708
        %v829 = vpack.c.b16 %v711, %v709
        %v830 = vpack.c.b16 %v714, %v712
        %v831 = vpack.c.b16 %v715, %v713
        %v832 = vpack.c.b16 %v718, %v716
        %v833 = vpack.c.b16 %v719, %v717
        %v834 = vpack.c.b16 %v722, %v720
        %v835 = vpack.c.b16 %v723, %v721
        %v836 = vpack.c.b16 %v726, %v724
        %v837 = vpack.c.b16 %v727, %v725
        %v838 = vpack.c.b16 %v730, %v728
        %v839 = vpack.c.b16 %v731, %v729
        %v840 = vpack.c.b16 %v734, %v732
        %v841 = vpack.c.b16 %v735, %v733
        %v842 = vpack.c.b16 %v738, %v736
        %v843 = vpack.c.b16 %v739, %v737
        %v844 = vpack.c.b16 %v742, %v740
        %v845 = vpack.c.b16 %v743, %v741
        %v846 = vpack.c.b16 %v746, %v744
        %v847 = vpack.c.b16 %v747, %v745
        %v848 = vpack.c.b16 %v750, %v748
        %v849 = vpack.c.b16 %v751, %v749
        %v850 = vpack.c.b16 %v754, %v752
        %v851 = vpack.c.b16 %v755, %v753
        %v852 = vpack.c.b16 %v758, %v756
        %v853 = vpack.c.b16 %v759, %v757
        %v854 = vpack.c.b16 %v762, %v760
        %v855 = vpack.c.b16 %v763, %v761
        %v856 = vpack.c.b16 %v766, %v764
        %v857 = vpack.c.b16 %v767, %v765
        %v858 = vpack.c.b16 %v770, %v768
        %v859 = vpack.c.b16 %v771, %v769
        %v860 = vpack.c.b16 %v774, %v772
        %v861 = vpack.c.b16 %v775, %v773
        %v862 = vpack.c.b16 %v778, %v776
        %v863 = vpack.c.b16 %v779, %v777
        %v864 = vpack.c.b16 %v782, %v780
        %v865 = vpack.c.b16 %v783, %v781
        %v866 = vpack.c.b16 %v786, %v784
        %v867 = vpack.c.b16 %v787, %v785
        %v868 = vpack.c.b16 %v790, %v788
        %v869 = vpack.c.b16 %v791, %v789
        %v870 = vpack.c.b16 %v794, %v792
        %v871 = vpack.c.b16 %v795, %v793
        %v872 = vpack.c.b16 %v798, %v796
        %v873 = vpack.c.b16 %v799, %v797
        %v874 = vpack.c.b16 %v802, %v800
        %v875 = vpack.c.b16 %v803, %v801
        %v876 = vpack.c.b16 %v806, %v804
        %v877 = vpack.c.b16 %v807, %v805
        %v878 = vpack.c.b16 %v810, %v808
        %v879 = vpack.c.b16 %v811, %v809
        %v880 = vpack.c.b16 %v814, %v812
        %v881 = vpack.c.b16 %v815, %v813
        %v882 = vpack.c.b16 %v818, %v816
        %v883 = vpack.c.b16 %v819, %v817
        %948 = vmatprep.subr.bf16.mxu0 %v821
        %949 = vmatpush1.bf16.msra.mxu0 %v820
        %950 = vmatprep.subr.bf16.mxu0 %v823
        %951 = vmatpush1.bf16.msra.mxu0 %v822
        %952 = vmatprep.subr.bf16.mxu0 %v825
        %953 = vmatpush1.bf16.msra.mxu0 %v824
        %954 = vmatprep.subr.bf16.mxu0 %v827
        %955 = vmatpush1.bf16.msra.mxu0 %v826
        %956 = vmatprep.subr.bf16.mxu0 %v829
        %957 = vmatpush1.bf16.msra.mxu0 %v828
        %958 = vmatprep.subr.bf16.mxu0 %v831
        %959 = vmatpush1.bf16.msra.mxu0 %v830
        %960 = vmatprep.subr.bf16.mxu0 %v833
        %961 = vmatpush1.bf16.msra.mxu0 %v832
        %962 = vmatprep.subr.bf16.mxu0 %v835
        %963 = vmatpush1.bf16.msra.mxu0 %v834
        %964 = vmatprep.subr.bf16.mxu0 %v837
        %965 = vmatpush1.bf16.msra.mxu0 %v836
        %966 = vmatprep.subr.bf16.mxu0 %v839
        %967 = vmatpush1.bf16.msra.mxu0 %v838
        %968 = vmatprep.subr.bf16.mxu0 %v841
        %969 = vmatpush1.bf16.msra.mxu0 %v840
        %970 = vmatprep.subr.bf16.mxu0 %v843
        %971 = vmatpush1.bf16.msra.mxu0 %v842
        %972 = vmatprep.subr.bf16.mxu0 %v845
        %973 = vmatpush1.bf16.msra.mxu0 %v844
        %974 = vmatprep.subr.bf16.mxu0 %v847
        %975 = vmatpush1.bf16.msra.mxu0 %v846
        %976 = vmatprep.subr.bf16.mxu0 %v849
        %977 = vmatpush1.bf16.msra.mxu0 %v848
        %978 = vmatprep.subr.bf16.mxu0 %v851
        %979 = vmatpush1.bf16.msra.mxu0 %v850
        %980 = vmatprep.mubr.bf16.mxu0 %v561
        %981 = vmatmul.mubr.bf16.gmra.mrb[0].mxu0 %v560
        %v982 = vpop.f32.mrb[0].mxu0
        %v983 = vadd.f32 0.0, %v982
        %v984 = vpop.f32.mrb[0].mxu0
        %v985 = vadd.f32 0.0, %v984
        %v986 = vpop.f32.mrb[0].mxu0
        %v987 = vpop.f32.mrb[0].mxu0
        %988 = vdwg.mxu0
        %989 = vmatprep.subr.bf16.mxu0 %v853
        %990 = vmatpush1.bf16.msra.mxu0 %v852
        %991 = vmatprep.subr.bf16.mxu0 %v855
        %992 = vmatpush1.bf16.msra.mxu0 %v854
        %993 = vmatprep.subr.bf16.mxu0 %v857
        %994 = vmatpush1.bf16.msra.mxu0 %v856
        %995 = vmatprep.subr.bf16.mxu0 %v859
        %996 = vmatpush1.bf16.msra.mxu0 %v858
        %997 = vmatprep.subr.bf16.mxu0 %v861
        %998 = vmatpush1.bf16.msra.mxu0 %v860
        %999 = vmatprep.subr.bf16.mxu0 %v863
        %1000 = vmatpush1.bf16.msra.mxu0 %v862
        %1001 = vmatprep.subr.bf16.mxu0 %v865
        %1002 = vmatpush1.bf16.msra.mxu0 %v864
        %1003 = vmatprep.subr.bf16.mxu0 %v867
        %1004 = vmatpush1.bf16.msra.mxu0 %v866
        %1005 = vmatprep.subr.bf16.mxu0 %v869
        %1006 = vmatpush1.bf16.msra.mxu0 %v868
        %1007 = vmatprep.subr.bf16.mxu0 %v871
        %1008 = vmatpush1.bf16.msra.mxu0 %v870
        %1009 = vmatprep.subr.bf16.mxu0 %v873
        %1010 = vmatpush1.bf16.msra.mxu0 %v872
        %1011 = vmatprep.subr.bf16.mxu0 %v875
        %1012 = vmatpush1.bf16.msra.mxu0 %v874
        %1013 = vmatprep.subr.bf16.mxu0 %v877
        %1014 = vmatpush1.bf16.msra.mxu0 %v876
        %1015 = vmatprep.subr.bf16.mxu0 %v879
        %1016 = vmatpush1.bf16.msra.mxu0 %v878
        %1017 = vmatprep.subr.bf16.mxu0 %v881
        %1018 = vmatpush1.bf16.msra.mxu0 %v880
        %1019 = vmatprep.subr.bf16.mxu0 %v883
        %1020 = vmatpush1.bf16.msra.mxu0 %v882
        %1021 = vmatprep.mubr.bf16.mxu0 %v563
        %1022 = vmatmul.mubr.bf16.gmra.mrb[0].mxu0 %v562
        %v1023 = vpop.f32.mrb[0].mxu0
        %v1024 = vadd.f32 %v983, %v1023
        %v1025 = vpop.f32.mrb[0].mxu0
        %v1026 = vadd.f32 %v985, %v1025
        %v1027 = vpop.f32.mrb[0].mxu0
        %v1028 = vpop.f32.mrb[0].mxu0
        %1029 = vdwg.mxu0
        %v1030 = vxor.u32 %v1024, 2147483648
        %v1031 = vxor.u32 %v1026, 2147483648
        %v1032 = vmul.f32 %v1030, 1.442695
        %v1033 = vpow.pop %v1032
        %v1034 = vmul.f32 %v1031, 1.442695
        %v1035 = vpow.pop %v1034
        %v1036 = vadd.f32 %v1033, 1.0
        %v1037 = vadd.f32 %v1035, 1.0
        %v1038 = vrcp.pop %v1036
        %v1039 = vmul.f32 1.0, %v1038
        %v1040 = vrcp.pop %v1037
        %v1041 = vmul.f32 1.0, %v1040
        %v1042 = vlaneseq
        %v1043 = vshrl.u32 %v1042, 7
        %v1044 = vsub.s32 0, %v1043
        %v1045 = vrot.slane %v1039, %v1044
        %v1046 = vlaneseq
        %v1047 = vshrl.u32 %v1046, 7
        %v1048 = vsub.s32 0, %v1047
        %v1049 = vrot.slane %v1041, %v1048
        %v1050 = vmul.f32 %v513, %v1045
        %v1051 = vmul.f32 %v514, %v1049
        %v1052 = vmul.f32 %v515, %v1045
        %v1053 = vmul.f32 %v516, %v1049
        %v1054 = vmul.f32 %v517, %v1045
        %v1055 = vmul.f32 %v518, %v1049
        %v1056 = vmul.f32 %v519, %v1045
        %v1057 = vmul.f32 %v520, %v1049
        %1058 = vst [vmem:[%s230] sm:$0xff] %v1050
        %1059 = vst [vmem:[%s230 + $0x8] sm:$0xff] %v1051
        %1060 = vst [vmem:[%s230 + $0x10] sm:$0xff] %v1052
        %1061 = vst [vmem:[%s230 + $0x18] sm:$0xff] %v1053
        %1062 = vst [vmem:[%s230 + $0x20] sm:$0xff] %v1054
        %1063 = vst [vmem:[%s230 + $0x28] sm:$0xff] %v1055
        %1064 = vst [vmem:[%s230 + $0x30] sm:$0xff] %v1056
        %1065 = vst [vmem:[%s230 + $0x38] sm:$0xff] %v1057
        %s1066 = sand.u32 %s119, 1
        %s1067 = scalar_lea.sflag [#allocation4], %s1066
        %s1068 = sand.u32 %s119, 1
        %s1069 = smul.addr %s1068, 64
        %s1070 = scalar_lea.vmem [#allocation7], %s1069
        // Predicated region
        $region45: #{tpu_custom_call.1} parent=35 // pred_check
          %p1071 = pneg %p129
        $region46: #{tpu_custom_call.1} parent=35 // pred_check_branch
          %1073 = sbr.rel (%p1071) target = $region48
        $region47: #{tpu_custom_call.1} parent=35 // pred_region
          %s1075 = ssub.s32 1024, 1024
          %1076 = vsyncadd %s1067, %s1075
          %s1077 = smul.addr %s22, 8
          %s1078 = smul.addr %s1077, 128
          %s1079 = scalar_lea.hbm %s4, %s1078
          %s1080 = sshll.u32 %s1070, 4
          %s1081 = int_to_ptr.vmem [resolvable:$true] %s1080
          %1086 = dma.vmem_to_hbm [thread:$0]  %s1081, 1024, %s1079, %s1067, 256, 256, 16
        $region48: #{tpu_custom_call.1} parent=35 // pred_fallthru
          _
      $region36: #{tpu_custom_call.1} parent=5 // pred_fallthru
        _
      %p1087 = scmp.le.s32.totalorder 2, %s17
      // Predicated region
      $region49: #{tpu_custom_call.1} parent=5 // pred_check
        %p1088 = pneg %p1087
      $region50: #{tpu_custom_call.1} parent=5 // pred_check_branch
        %1090 = sbr.rel (%p1088) target = $region52
      $region51: #{tpu_custom_call.1} parent=5 // pred_region
        %s1091 = ssub.s32 %s17, 2
        // Predicated region
        $region53: #{tpu_custom_call.1} parent=51 // pred_check
          %p1092 = pneg %p135
        $region54: #{tpu_custom_call.1} parent=51 // pred_check_branch
          %1094 = sbr.rel (%p1092) target = $region56
        $region55: #{tpu_custom_call.1} parent=51 // pred_region
          %s1095 = sand.u32 %s120, 1
          %s1096 = scalar_lea.sflag [#allocation4], %s1095
          %s1097 = sand.u32 %s120, 1
          %s1098 = smul.addr %s1097, 64
          %s1099 = scalar_lea.vmem [#allocation7], %s1098
          %1100 = dma.done %s1096, 1024
        $region56: #{tpu_custom_call.1} parent=51 // pred_fallthru
          _
      $region52: #{tpu_custom_call.1} parent=5 // pred_fallthru
        _
    $region6: #{tpu_custom_call.1} parent=1 // loop_footer
      %s21 = sadd.s32 1, %s17
    $region7: #{tpu_custom_call.1} parent=1 // loop_footer_branch
      %16 = sbr.rel target = $region3
    $region8: #{tpu_custom_call.1} parent=1 // loop_exit
      _
    %1101 = vsyncpa [#allocation3], 1
    %s1102 = scalar_lea.sflag [#allocation3], 1
    %1103 = vsyncpa %s1102, 1
    %1104 = vsyncpa [#allocation6], 1
    %1105 = vsyncpa [#allocation4], 1
    %s1106 = scalar_lea.sflag [#allocation4], 1
    %1107 = vsyncpa %s1106, 1

</llo_original>
